<compile_context>
chip_gen: v6e
topology: v6e:2x2x1
jax: 0.10.0
libtpu: 0.0.40
codegen_flags: <defaults>
</compile_context>

<pallas_src>
import jax
import jax.numpy as jnp
from jax import lax
from jax.experimental import pallas as pl
from jax.experimental.pallas import tpu as pltpu


def _round_up(x, m):
    return ((x + m - 1) // m) * m


def _vmem_capacity_bytes():
    """Physical VMEM per TensorCore (v5e/v6e: 128 MiB, v7x: 64 MiB)."""
    try:
        info = pltpu.get_tpu_info()
        cap = getattr(info, "vmem_capacity_bytes", None)
        if cap:
            return int(cap)
    except Exception:
        pass
    return 64 * 1024 * 1024  # conservative default (v7x per-core VMEM)


def _plan_dim(size, max_tile, align):
    """Pick (padded_size, tile) with tile an exact divisor of padded_size.

    If the dim fits one tile we keep the full (possibly unaligned) extent --
    block_shape == array dim always satisfies the TPU tiling rule -- so no
    zero-pad copy is needed for that dim.
    """
    if size <= max_tile:
        return size, size
    padded = _round_up(size, align)
    tile = max(align, (max_tile // align) * align)
    while padded % tile != 0:
        tile -= align
    return padded, tile


def _linear_single_kernel(x_ref, w_ref, b_ref, o_ref):
    """Single-shot y = x @ W.T + b; whole problem resident in VMEM."""
    o_ref[...] = (
        lax.dot_general(
            x_ref[...],
            w_ref[...],
            dimension_numbers=(((1,), (1,)), ((), ())),  # contract K with K
            preferred_element_type=jnp.float32,
        )
        + b_ref[...].astype(jnp.float32)
    ).astype(o_ref.dtype)


def _linear_tiled_kernel(x_ref, w_ref, b_ref, o_ref, acc_ref):
    """(M, N, K)-tiled y = x @ W.T + b with f32 scratch accumulation."""
    k = pl.program_id(2)

    @pl.when(k == 0)
    def _():
        # Bias is the k==0 initializer: no zero pass, no "+ b" epilogue.
        acc_ref[...] = jnp.broadcast_to(
            b_ref[...].astype(jnp.float32), acc_ref.shape
        )

    acc_ref[...] += lax.dot_general(
        x_ref[...],
        w_ref[...],
        dimension_numbers=(((1,), (1,)), ((), ())),
        preferred_element_type=jnp.float32,
    )

    @pl.when(k == pl.num_programs(2) - 1)
    def _():
        # One store per (i, j) tile; no per-k RMW of the output block.
        o_ref[...] = acc_ref[...].astype(o_ref.dtype)


def simple_linear_model(
    x_nchw,
    weight,
    bias,
    *,
    max_tm=256,
    max_tk=1024,
    max_tn=512,
    single_shot_bytes=None,
    use_bf16_inputs=False,
):
    """Pallas equivalent of SimpleLinearModel.forward.

    x_nchw: (B, C, H, W)
    weight: (output_dim, input_dim)  -- torch Linear convention, used as-is
    bias:   (output_dim,)
    returns: (B, output_dim) in x's dtype
    """
    B = x_nchw.shape[0]
    x_flat = x_nchw.reshape(B, -1)  # Flatten (row-major, like torch.nn.Flatten)
    K = x_flat.shape[1]
    N = weight.shape[0]
    out_dtype = x_flat.dtype

    if use_bf16_inputs:
        # TODO(synk): in a real deployment store/serve the weight as bf16 so
        # this cast isn't an extra HBM pass; f32 accumulation is kept either way.
        x_flat = x_flat.astype(jnp.bfloat16)
        weight = weight.astype(jnp.bfloat16)
    in_itemsize = jnp.dtype(x_flat.dtype).itemsize
    out_itemsize = jnp.dtype(out_dtype).itemsize

    vmem_cap = _vmem_capacity_bytes()
    # ~40 MiB budget on v7x (64 MiB VMEM), ~80 MiB on v5e/v6e (128 MiB VMEM).
    budget = (5 * vmem_cap) // 8
    if single_shot_bytes is None:
        single_shot_bytes = budget

    # Big-VMEM chips (v5e/v6e) + small batch: stream wider weight slabs
    # (fewer re-reads of the x K-stripe, fewer grid steps).
    if vmem_cap >= (96 << 20) and B <= 64:
        max_tn = max(max_tn, 1024)

    single_footprint = (
        (B * K + N * K) * in_itemsize + B * N * out_itemsize + N * 4
    )
    cost = pl.CostEstimate(
        flops=2 * B * K * N,
        transcendentals=0,
        bytes_accessed=single_footprint,
    )

    bias2d = bias.reshape(1, N)

    if single_footprint <= single_shot_bytes:
        # Grid-less, full-block kernel: no padding copies at all, one MXU
        # pass, one DMA per operand, explicit VMEM placement.
        vmem_limit = min(
            (3 * vmem_cap) // 4, max(32 << 20, single_footprint + (8 << 20))
        )
        return pl.pallas_call(
            _linear_single_kernel,
            out_shape=jax.ShapeDtypeStruct((B, N), out_dtype),
            in_specs=[
                pl.BlockSpec(memory_space=pltpu.MemorySpace.VMEM),
                pl.BlockSpec(memory_space=pltpu.MemorySpace.VMEM),
                pl.BlockSpec(memory_space=pltpu.MemorySpace.VMEM),
            ],
            out_specs=pl.BlockSpec(memory_space=pltpu.MemorySpace.VMEM),
            compiler_params=pltpu.CompilerParams(vmem_limit_bytes=vmem_limit),
            cost_estimate=cost,
        )(x_flat, weight, bias2d)

    # ---------------- tiled fallback path ----------------
    # Tiles are exact divisors of the aligned dims (no round-up padding by a
    # tile); shrink tiles until the double-buffered working set fits the
    # per-generation VMEM budget.
    cur_tm, cur_tk, cur_tn = max_tm, max_tk, max_tn
    while True:
        B_pad, tm = _plan_dim(B, cur_tm, 8)
        K_pad, tk = _plan_dim(K, cur_tk, 128)
        N_pad, tn = _plan_dim(N, cur_tn, 128)
        tile_fp = (
            2 * tm * tk * in_itemsize      # x double buffer
            + 2 * tn * tk * in_itemsize    # W double buffer
            + 2 * tn * in_itemsize         # bias double buffer
            + 2 * tm * tn * out_itemsize   # output double buffer
            + tm * tn * 4                  # f32 accumulator scratch
        )
        if tile_fp <= budget or (cur_tk <= 128 and cur_tn <= 128 and cur_tm <= 8):
            break
        if cur_tk > 128:
            cur_tk //= 2
        elif cur_tn > 128:
            cur_tn //= 2
        else:
            cur_tm = max(8, cur_tm // 2)

    # Zero-pad only dims that actually changed (zero padding of the
    # contraction dim is exact; padded output rows/cols are sliced off).
    if (B_pad, K_pad) != x_flat.shape:
        x_p = jnp.zeros((B_pad, K_pad), x_flat.dtype).at[:B, :K].set(x_flat)
    else:
        x_p = x_flat
    if (N_pad, K_pad) != weight.shape:
        w_p = jnp.zeros((N_pad, K_pad), weight.dtype).at[:N, :K].set(weight)
    else:
        w_p = weight
    if N_pad != N:
        b_p = jnp.zeros((1, N_pad), bias.dtype).at[:, :N].set(bias2d)
    else:
        b_p = bias2d

    grid = (B_pad // tm, N_pad // tn, K_pad // tk)
    vmem_limit = min((3 * vmem_cap) // 4, max(32 << 20, tile_fp + (8 << 20)))

    out = pl.pallas_call(
        _linear_tiled_kernel,
        out_shape=jax.ShapeDtypeStruct((B_pad, N_pad), out_dtype),
        grid_spec=pltpu.PrefetchScalarGridSpec(
            num_scalar_prefetch=0,
            grid=grid,
            in_specs=[
                pl.BlockSpec((tm, tk), lambda i, j, k: (i, k)),   # x tile
                pl.BlockSpec((tn, tk), lambda i, j, k: (j, k)),   # W (N,K) tile
                pl.BlockSpec((1, tn), lambda i, j, k: (0, j)),    # bias tile
            ],
            out_specs=pl.BlockSpec((tm, tn), lambda i, j, k: (i, j)),
            scratch_shapes=[pltpu.VMEM((tm, tn), jnp.float32)],
        ),
        compiler_params=pltpu.CompilerParams(
            # Leading parallel M axis gives v7x's two TensorCores work even
            # when N fits a single tile; K (reduction) stays last.
            dimension_semantics=("parallel", "parallel", "arbitrary"),
            vmem_limit_bytes=vmem_limit,
        ),
        cost_estimate=cost,
    )(x_p, w_p, b_p)

    if (B_pad, N_pad) != (B, N):
        out = out[:B, :N]
    return out


if __name__ == "__main__":
    # Small shapes consistent with the module: B=2, C=3, H=W=16 -> input_dim=768
    B, C, H, W = 2, 3, 16, 16
    input_dim = C * H * W
    output_dim = 32

    key = jax.random.PRNGKey(0)
    kx, kw, kb = jax.random.split(key, 3)

    x = jax.random.normal(kx, (B, C, H, W), dtype=jnp.float32)
    # Deterministic torch-Linear-like uniform init (bound 1/sqrt(in)).
    bound = 1.0 / (input_dim ** 0.5)
    weight = jax.random.uniform(
        kw, (output_dim, input_dim), minval=-bound, maxval=bound, dtype=jnp.float32
    )
    bias = jax.random.uniform(
        kb, (output_dim,), minval=-bound, maxval=bound, dtype=jnp.float32
    )

    ref = x.reshape(B, -1) @ weight.T + bias

    # Primary path: single-shot, grid-less kernel (no padding copies at all).
    out = jax.block_until_ready(simple_linear_model(x, weight, bias))
    assert out.shape == (B, output_dim)
    assert jnp.allclose(out, ref, atol=1e-4, rtol=1e-4), "single-shot mismatch"

    # Also exercise the tiled fallback path (forced) to keep it honest.
    out_tiled = jax.block_until_ready(
        simple_linear_model(
            x, weight, bias, single_shot_bytes=0, max_tk=256, max_tn=128
        )
    )
    assert jnp.allclose(out_tiled, ref, atol=1e-4, rtol=1e-4), "tiled mismatch"

    print("KERNEL_OK")
</pallas_src>

<mosaic_0001>
module attributes {stable_mosaic.version = 11 : i64} {
  func.func @_linear_single_kernel(%arg0: memref<2x768xf32, #tpu.memory_space<vmem>>, %arg1: memref<32x768xf32, #tpu.memory_space<vmem>>, %arg2: memref<1x32xf32, #tpu.memory_space<vmem>>, %arg3: memref<2x32xf32, #tpu.memory_space<vmem>>) attributes {dimension_semantics = [], scalar_prefetch = 0 : i64, scratch_operands = 0 : i64, tpu.core_type = #tpu.core_type<tc>} {
    %c0 = arith.constant 0 : index
    %c0_0 = arith.constant 0 : index
    %0 = vector.load %arg0[%c0, %c0_0] : memref<2x768xf32, #tpu.memory_space<vmem>>, vector<2x768xf32>
    %c0_1 = arith.constant 0 : index
    %c0_2 = arith.constant 0 : index
    %1 = vector.load %arg1[%c0_1, %c0_2] : memref<32x768xf32, #tpu.memory_space<vmem>>, vector<32x768xf32>
    %cst = arith.constant dense<0.000000e+00> : vector<2x32xf32>
    %2 = tpu.matmul %0, %1, %cst {dimension_numbers = #tpu.dot_dimension_numbers<[1], [1], [0], [0], [0, 0, 1, 0], [], []>} : vector<2x768xf32>, vector<32x768xf32>, vector<2x32xf32> -> vector<2x32xf32>
    %c0_3 = arith.constant 0 : index
    %c0_4 = arith.constant 0 : index
    %3 = vector.load %arg2[%c0_3, %c0_4] : memref<1x32xf32, #tpu.memory_space<vmem>>, vector<1x32xf32>
    %4 = vector.broadcast %3 : vector<1x32xf32> to vector<2x32xf32>
    %5 = arith.addf %2, %4 : vector<2x32xf32>
    %c0_5 = arith.constant 0 : index
    %c0_6 = arith.constant 0 : index
    %6 = vector.load %arg3[%c0_5, %c0_6] : memref<2x32xf32, #tpu.memory_space<vmem>>, vector<2x32xf32>
    tpu.vector_store %arg3[%c0_5, %c0_6], %5 {strides = array<i32>} : memref<2x32xf32, #tpu.memory_space<vmem>>, vector<2x32xf32>,
    return
  }
}

</mosaic_0001>

<llo_original>
// kernel: tpu_custom_call.1
$region0: #{tpu_custom_call.1}
  #allocation0 [shape = 'u32[]', space=smem, size = 0x4, offset = 0x4, fixed_abs, tag = 'smem constant byte address 0x4 - core index']
  #allocation1 [shape = 'u32[144,128]{1,0:T(1,128)}', space=vmem, size = 0x12000, scoped, tag = 'internal scratch']
  %s0 = inlined_call_operand.hbm [shape: f32[2,768], index: 0, kind: input, shape index: {}]
  %s1 = inlined_call_operand.hbm [shape: f32[32,768], index: 1, kind: input, shape index: {}]
  %s2 = inlined_call_operand.vmem [shape: f32[1,32], index: 2, kind: input, shape index: {}]
  %s3 = inlined_call_operand.hbm [shape: f32[2,32], index: 3, kind: output, shape index: {}]
  %s4 = sld [smem:[#allocation0]]
  $region30: #{tpu_custom_call.1} parent=0
    _
  %s6 = ssub.s32 1, %s4
  %s7 = scalar_select 0, %s6, %s4
  $region1: #{tpu_custom_call.1} parent=0
    #allocation2 [shape = 'u8[6144]{0}', space=vmem, size = 0x1800, scoped, tag = 'input window, operand 0, single buffered']
    #allocation3 [shape = 's32[1]{0}', space=sflag, size = 0x4, scoped, tag = 'scoped memory for tpu_custom_call.1']
    #allocation4 [shape = 's32[1]{0}', space=sflag, size = 0x4, scoped, tag = 'scoped memory for tpu_custom_call.1']
    #allocation5 [shape = 'u8[98304]{0}', space=vmem, size = 0x18000, scoped, tag = 'input window, operand 1, single buffered']
    #allocation6 [shape = 's32[1]{0}', space=sflag, size = 0x4, scoped, tag = 'scoped memory for tpu_custom_call.1']
    #allocation7 [shape = 'u8[1024]{0}', space=vmem, size = 0x400, scoped, tag = 'output window, operand 0, single buffered']
    %8 = vsyncpa [#allocation3], 0
    %9 = vsyncpa [#allocation6], 0
    %10 = vsyncpa [#allocation4], 0
    // Predicated region
    $region2: #{tpu_custom_call.1} parent=1 // pred_check
      _
    $region3: #{tpu_custom_call.1} parent=1 // pred_check_branch
      %12 = sbr.rel (0) target = $region5
    $region4: #{tpu_custom_call.1} parent=1 // pred_region
      %s14 = ssub.s32 192, 192
      %15 = vsyncadd [#allocation3], %s14
      %s17 = sshll.u32 [#allocation2], 4
      %s18 = int_to_ptr.vmem [resolvable:$true] %s17
      %20 = dma.hbm_to_vmem [thread:$0]  %s0, 192, %s18, [#allocation3]
    $region5: #{tpu_custom_call.1} parent=1 // pred_fallthru
      _
    // Predicated region
    $region6: #{tpu_custom_call.1} parent=1 // pred_check
      _
    $region7: #{tpu_custom_call.1} parent=1 // pred_check_branch
      %22 = sbr.rel (0) target = $region9
    $region8: #{tpu_custom_call.1} parent=1 // pred_region
      %s24 = ssub.s32 3072, 3072
      %25 = vsyncadd [#allocation6], %s24
      %s26 = sshll.u32 [#allocation5], 4
      %s27 = int_to_ptr.vmem [resolvable:$true] %s26
      %32 = dma.hbm_to_vmem [thread:$0]  %s1, 3072, %s27, [#allocation6], 768, 768, 48
    $region9: #{tpu_custom_call.1} parent=1 // pred_fallthru
      _
    // Predicated region
    $region10: #{tpu_custom_call.1} parent=1 // pred_check
      _
    $region11: #{tpu_custom_call.1} parent=1 // pred_check_branch
      %34 = sbr.rel (0) target = $region13
    $region12: #{tpu_custom_call.1} parent=1 // pred_region
      _
    $region13: #{tpu_custom_call.1} parent=1 // pred_fallthru
      _
    // Predicated region
    $region14: #{tpu_custom_call.1} parent=1 // pred_check
      _
    $region15: #{tpu_custom_call.1} parent=1 // pred_check_branch
      %36 = sbr.rel (0) target = $region17
    $region16: #{tpu_custom_call.1} parent=1 // pred_region
      %37 = dma.done [#allocation3], 192
    $region17: #{tpu_custom_call.1} parent=1 // pred_fallthru
      _
    // Predicated region
    $region18: #{tpu_custom_call.1} parent=1 // pred_check
      _
    $region19: #{tpu_custom_call.1} parent=1 // pred_check_branch
      %39 = sbr.rel (0) target = $region21
    $region20: #{tpu_custom_call.1} parent=1 // pred_region
      %40 = dma.done [#allocation6], 3072
    $region21: #{tpu_custom_call.1} parent=1 // pred_fallthru
      _
    %v41 = vld [vmem:[#allocation2] sm:$0xff]
    %v42 = vld [vmem:[#allocation2 + $0x8] sm:$0xf]
    %v43 = vld [vmem:[#allocation5] sm:$0xff]
    %v44 = vld [vmem:[#allocation5 + $0x8] sm:$0xff]
    %v45 = vld [vmem:[#allocation5 + $0x10] sm:$0xff]
    %v46 = vld [vmem:[#allocation5 + $0x18] sm:$0xff]
    %v47 = vld [vmem:[#allocation5 + $0x20] sm:$0xff]
    %v48 = vld [vmem:[#allocation5 + $0x28] sm:$0xff]
    %v49 = vld [vmem:[#allocation5 + $0x30] sm:$0xff]
    %v50 = vld [vmem:[#allocation5 + $0x38] sm:$0xff]
    %v51 = vld [vmem:[#allocation5 + $0x40] sm:$0xff]
    %v52 = vld [vmem:[#allocation5 + $0x48] sm:$0xff]
    %v53 = vld [vmem:[#allocation5 + $0x50] sm:$0xff]
    %v54 = vld [vmem:[#allocation5 + $0x58] sm:$0xff]
    %v55 = vld [vmem:[#allocation5 + $0x60] sm:$0xff]
    %v56 = vld [vmem:[#allocation5 + $0x68] sm:$0xff]
    %v57 = vld [vmem:[#allocation5 + $0x70] sm:$0xff]
    %v58 = vld [vmem:[#allocation5 + $0x78] sm:$0xff]
    %v59 = vld [vmem:[#allocation5 + $0x80] sm:$0xff]
    %v60 = vld [vmem:[#allocation5 + $0x88] sm:$0xff]
    %v61 = vld [vmem:[#allocation5 + $0x90] sm:$0xff]
    %v62 = vld [vmem:[#allocation5 + $0x98] sm:$0xff]
    %v63 = vld [vmem:[#allocation5 + $0xa0] sm:$0xff]
    %v64 = vld [vmem:[#allocation5 + $0xa8] sm:$0xff]
    %v65 = vld [vmem:[#allocation5 + $0xb0] sm:$0xff]
    %v66 = vld [vmem:[#allocation5 + $0xb8] sm:$0xff]
    %v67 = vld [vmem:[%s2] sm:$0x1]
    %v69 = vlaneseq
    %v70 = vshrl.u32 %v69, 7
    %v71 = vsub.s32 0, %v70
    %v72 = vrot.slane %v67, %v71
    %v76 = vcombine.high %v41, %v41
    %v78 = vunpack.c.l.s4 1983009808
    %v79 = vunpack.c.0.s8 %v78
    %v80 = vlaneseq
    %v81 = vshrl.u32 %v80, 7
    %v82 = vsub.s32 %v79, %v81
    %v83 = vrot.slane %v41, %v82
    %v85 = vunpack.c.l.s4 1983009808
    %v86 = vunpack.c.0.s8 %v85
    %v87 = vlaneseq
    %v88 = vshrl.u32 %v87, 7
    %v89 = vsub.s32 %v86, %v88
    %v90 = vrot.slane %v76, %v89
    %v91 = vcombine.high %v83, %v83
    %v92 = vcombine.high %v90, %v90
    %v94 = vunpack.c.l.s4 1983009808
    %v95 = vunpack.c.0.s8 %v94
    %v96 = vlaneseq
    %v97 = vshrl.u32 %v96, 7
    %v98 = vsub.s32 %v95, %v97
    %v99 = vrot.slane %v42, %v98
    %v100 = vcombine.high %v99, %v99
    %107 = vmatprep.subr.mxu0 0.0
    %108 = vmatpush1.xpose.msra.mxu0 0.0
    %109 = vmatprep.subr.mxu0 0.0
    %110 = vmatpush1.xpose.msra.mxu0 0.0
    %111 = vmatprep.subr.mxu0 0.0
    %112 = vmatpush1.xpose.msra.mxu0 0.0
    %113 = vmatprep.subr.mxu0 0.0
    %114 = vmatpush1.xpose.msra.mxu0 0.0
    %115 = vmatprep.subr.mxu0 0.0
    %116 = vmatpush1.xpose.msra.mxu0 0.0
    %117 = vmatprep.subr.mxu0 0.0
    %118 = vmatpush1.xpose.msra.mxu0 0.0
    %119 = vmatprep.subr.mxu0 0.0
    %120 = vmatpush1.xpose.msra.mxu0 0.0
    %121 = vmatprep.subr.mxu0 0.0
    %122 = vmatpush1.xpose.msra.mxu0 0.0
    %123 = vmatprep.subr.mxu0 0.0
    %124 = vmatpush1.xpose.msra.mxu0 0.0
    %125 = vmatprep.subr.mxu0 0.0
    %126 = vmatpush1.xpose.msra.mxu0 0.0
    %127 = vmatprep.subr.mxu0 0.0
    %128 = vmatpush1.xpose.msra.mxu0 0.0
    %129 = vmatprep.subr.mxu0 0.0
    %130 = vmatpush1.xpose.msra.mxu0 0.0
    %131 = vmatprep.subr.mxu0 %v62
    %132 = vmatpush1.xpose.msra.mxu0 %v61
    %133 = vmatprep.subr.mxu0 %v56
    %134 = vmatpush1.xpose.msra.mxu0 %v55
    %135 = vmatprep.subr.mxu0 %v50
    %136 = vmatpush1.xpose.msra.mxu0 %v49
    %137 = vmatprep.subr.mxu0 %v44
    %138 = vmatpush1.xpose.msra.mxu0 %v43
    %139 = vmatprep.subr.mxu0 0.0
    %140 = vmatpush2.xpose.msra.mxu0 0.0
    %141 = vmatprep.subr.mxu0 0.0
    %142 = vmatpush2.xpose.msra.mxu0 0.0
    %143 = vmatprep.subr.mxu0 0.0
    %144 = vmatpush2.xpose.msra.mxu0 0.0
    %145 = vmatprep.subr.mxu0 0.0
    %146 = vmatpush2.xpose.msra.mxu0 0.0
    %147 = vmatprep.subr.mxu0 0.0
    %148 = vmatpush2.xpose.msra.mxu0 0.0
    %149 = vmatprep.subr.mxu0 0.0
    %150 = vmatpush2.xpose.msra.mxu0 0.0
    %151 = vmatprep.subr.mxu0 0.0
    %152 = vmatpush2.xpose.msra.mxu0 0.0
    %153 = vmatprep.subr.mxu0 0.0
    %154 = vmatpush2.xpose.msra.mxu0 0.0
    %155 = vmatprep.subr.mxu0 0.0
    %156 = vmatpush2.xpose.msra.mxu0 0.0
    %157 = vmatprep.subr.mxu0 0.0
    %158 = vmatpush2.xpose.msra.mxu0 0.0
    %159 = vmatprep.subr.mxu0 0.0
    %160 = vmatpush2.xpose.msra.mxu0 0.0
    %161 = vmatprep.subr.mxu0 0.0
    %162 = vmatpush2.xpose.msra.mxu0 0.0
    %163 = vmatprep.subr.mxu0 0.0
    %164 = vmatpush2.xpose.msra.mxu0 0.0
    %165 = vmatprep.subr.mxu0 0.0
    %166 = vmatpush2.xpose.msra.mxu0 0.0
    %167 = vmatprep.subr.mxu0 0.0
    %168 = vmatpush2.xpose.msra.mxu0 0.0
    %169 = vmatprep.subr.mxu0 0.0
    %170 = vmatpush2.xpose.msra.mxu0 0.0
    %171 = vmatprep.mubr.f32.mxu0 %v91
    %172 = vmatmul.mubr.f32.gmra.mxu0 %v83
    %v173 = vpop.f32.mrf.mxu0
    %v174 = vadd.f32 %v72, %v173
    %v175 = vpop.f32.mrf.mxu0
    %176 = vdwg.mxu0
    %177 = vmatprep.subr.mxu0 0.0
    %178 = vmatpush1.xpose.msra.mxu0 0.0
    %179 = vmatprep.subr.mxu0 0.0
    %180 = vmatpush1.xpose.msra.mxu0 0.0
    %181 = vmatprep.subr.mxu0 0.0
    %182 = vmatpush1.xpose.msra.mxu0 0.0
    %183 = vmatprep.subr.mxu0 0.0
    %184 = vmatpush1.xpose.msra.mxu0 0.0
    %185 = vmatprep.subr.mxu0 0.0
    %186 = vmatpush1.xpose.msra.mxu0 0.0
    %187 = vmatprep.subr.mxu0 0.0
    %188 = vmatpush1.xpose.msra.mxu0 0.0
    %189 = vmatprep.subr.mxu0 0.0
    %190 = vmatpush1.xpose.msra.mxu0 0.0
    %191 = vmatprep.subr.mxu0 0.0
    %192 = vmatpush1.xpose.msra.mxu0 0.0
    %193 = vmatprep.subr.mxu0 0.0
    %194 = vmatpush1.xpose.msra.mxu0 0.0
    %195 = vmatprep.subr.mxu0 0.0
    %196 = vmatpush1.xpose.msra.mxu0 0.0
    %197 = vmatprep.subr.mxu0 0.0
    %198 = vmatpush1.xpose.msra.mxu0 0.0
    %199 = vmatprep.subr.mxu0 0.0
    %200 = vmatpush1.xpose.msra.mxu0 0.0
    %201 = vmatprep.subr.mxu0 %v64
    %202 = vmatpush1.xpose.msra.mxu0 %v63
    %203 = vmatprep.subr.mxu0 %v58
    %204 = vmatpush1.xpose.msra.mxu0 %v57
    %205 = vmatprep.subr.mxu0 %v52
    %206 = vmatpush1.xpose.msra.mxu0 %v51
    %207 = vmatprep.subr.mxu0 %v46
    %208 = vmatpush1.xpose.msra.mxu0 %v45
    %209 = vmatprep.subr.mxu0 0.0
    %210 = vmatpush2.xpose.msra.mxu0 0.0
    %211 = vmatprep.subr.mxu0 0.0
    %212 = vmatpush2.xpose.msra.mxu0 0.0
    %213 = vmatprep.subr.mxu0 0.0
    %214 = vmatpush2.xpose.msra.mxu0 0.0
    %215 = vmatprep.subr.mxu0 0.0
    %216 = vmatpush2.xpose.msra.mxu0 0.0
    %217 = vmatprep.subr.mxu0 0.0
    %218 = vmatpush2.xpose.msra.mxu0 0.0
    %219 = vmatprep.subr.mxu0 0.0
    %220 = vmatpush2.xpose.msra.mxu0 0.0
    %221 = vmatprep.subr.mxu0 0.0
    %222 = vmatpush2.xpose.msra.mxu0 0.0
    %223 = vmatprep.subr.mxu0 0.0
    %224 = vmatpush2.xpose.msra.mxu0 0.0
    %225 = vmatprep.subr.mxu0 0.0
    %226 = vmatpush2.xpose.msra.mxu0 0.0
    %227 = vmatprep.subr.mxu0 0.0
    %228 = vmatpush2.xpose.msra.mxu0 0.0
    %229 = vmatprep.subr.mxu0 0.0
    %230 = vmatpush2.xpose.msra.mxu0 0.0
    %231 = vmatprep.subr.mxu0 0.0
    %232 = vmatpush2.xpose.msra.mxu0 0.0
    %233 = vmatprep.subr.mxu0 0.0
    %234 = vmatpush2.xpose.msra.mxu0 0.0
    %235 = vmatprep.subr.mxu0 0.0
    %236 = vmatpush2.xpose.msra.mxu0 0.0
    %237 = vmatprep.subr.mxu0 0.0
    %238 = vmatpush2.xpose.msra.mxu0 0.0
    %239 = vmatprep.subr.mxu0 0.0
    %240 = vmatpush2.xpose.msra.mxu0 0.0
    %241 = vmatprep.mubr.f32.mxu0 %v92
    %242 = vmatmul.mubr.f32.gmra.mxu0 %v90
    %v243 = vpop.f32.mrf.mxu0
    %v244 = vadd.f32 %v174, %v243
    %v245 = vpop.f32.mrf.mxu0
    %246 = vdwg.mxu0
    %247 = vmatprep.subr.mxu0 0.0
    %248 = vmatpush1.xpose.msra.mxu0 0.0
    %249 = vmatprep.subr.mxu0 0.0
    %250 = vmatpush1.xpose.msra.mxu0 0.0
    %251 = vmatprep.subr.mxu0 0.0
    %252 = vmatpush1.xpose.msra.mxu0 0.0
    %253 = vmatprep.subr.mxu0 0.0
    %254 = vmatpush1.xpose.msra.mxu0 0.0
    %255 = vmatprep.subr.mxu0 0.0
    %256 = vmatpush1.xpose.msra.mxu0 0.0
    %257 = vmatprep.subr.mxu0 0.0
    %258 = vmatpush1.xpose.msra.mxu0 0.0
    %259 = vmatprep.subr.mxu0 0.0
    %260 = vmatpush1.xpose.msra.mxu0 0.0
    %261 = vmatprep.subr.mxu0 0.0
    %262 = vmatpush1.xpose.msra.mxu0 0.0
    %263 = vmatprep.subr.mxu0 0.0
    %264 = vmatpush1.xpose.msra.mxu0 0.0
    %265 = vmatprep.subr.mxu0 0.0
    %266 = vmatpush1.xpose.msra.mxu0 0.0
    %267 = vmatprep.subr.mxu0 0.0
    %268 = vmatpush1.xpose.msra.mxu0 0.0
    %269 = vmatprep.subr.mxu0 0.0
    %270 = vmatpush1.xpose.msra.mxu0 0.0
    %271 = vmatprep.subr.mxu0 %v66
    %272 = vmatpush1.xpose.msra.mxu0 %v65
    %273 = vmatprep.subr.mxu0 %v60
    %274 = vmatpush1.xpose.msra.mxu0 %v59
    %275 = vmatprep.subr.mxu0 %v54
    %276 = vmatpush1.xpose.msra.mxu0 %v53
    %277 = vmatprep.subr.mxu0 %v48
    %278 = vmatpush1.xpose.msra.mxu0 %v47
    %279 = vmatprep.subr.mxu0 0.0
    %280 = vmatpush2.xpose.msra.mxu0 0.0
    %281 = vmatprep.subr.mxu0 0.0
    %282 = vmatpush2.xpose.msra.mxu0 0.0
    %283 = vmatprep.subr.mxu0 0.0
    %284 = vmatpush2.xpose.msra.mxu0 0.0
    %285 = vmatprep.subr.mxu0 0.0
    %286 = vmatpush2.xpose.msra.mxu0 0.0
    %287 = vmatprep.subr.mxu0 0.0
    %288 = vmatpush2.xpose.msra.mxu0 0.0
    %289 = vmatprep.subr.mxu0 0.0
    %290 = vmatpush2.xpose.msra.mxu0 0.0
    %291 = vmatprep.subr.mxu0 0.0
    %292 = vmatpush2.xpose.msra.mxu0 0.0
    %293 = vmatprep.subr.mxu0 0.0
    %294 = vmatpush2.xpose.msra.mxu0 0.0
    %295 = vmatprep.subr.mxu0 0.0
    %296 = vmatpush2.xpose.msra.mxu0 0.0
    %297 = vmatprep.subr.mxu0 0.0
    %298 = vmatpush2.xpose.msra.mxu0 0.0
    %299 = vmatprep.subr.mxu0 0.0
    %300 = vmatpush2.xpose.msra.mxu0 0.0
    %301 = vmatprep.subr.mxu0 0.0
    %302 = vmatpush2.xpose.msra.mxu0 0.0
    %303 = vmatprep.subr.mxu0 0.0
    %304 = vmatpush2.xpose.msra.mxu0 0.0
    %305 = vmatprep.subr.mxu0 0.0
    %306 = vmatpush2.xpose.msra.mxu0 0.0
    %307 = vmatprep.subr.mxu0 0.0
    %308 = vmatpush2.xpose.msra.mxu0 0.0
    %309 = vmatprep.subr.mxu0 0.0
    %310 = vmatpush2.xpose.msra.mxu0 0.0
    %311 = vmatprep.mubr.f32.mxu0 %v100
    %312 = vmatmul.mubr.f32.gmra.mxu0 %v99
    %v313 = vpop.f32.mrf.mxu0
    %v314 = vadd.f32 %v244, %v313
    %v315 = vpop.f32.mrf.mxu0
    %316 = vdwg.mxu0
    %vm317 = vcmask 254976
    %318 = vst.msk [vmem:[#allocation7] sm:$0x3] %vm317, %v314
    // Predicated region
    $region22: #{tpu_custom_call.1} parent=1 // pred_check
      _
    $region23: #{tpu_custom_call.1} parent=1 // pred_check_branch
      %320 = sbr.rel (0) target = $region25
    $region24: #{tpu_custom_call.1} parent=1 // pred_region
      %s322 = ssub.s32 32, 32
      %323 = vsyncadd [#allocation4], %s322
      %s325 = sshll.u32 [#allocation7], 4
      %s326 = int_to_ptr.vmem [resolvable:$true] %s325
      %328 = dma.vmem_to_hbm [thread:$0]  %s326, 32, %s3, [#allocation4]
    $region25: #{tpu_custom_call.1} parent=1 // pred_fallthru
      _
    // Predicated region
    $region26: #{tpu_custom_call.1} parent=1 // pred_check
      _
    $region27: #{tpu_custom_call.1} parent=1 // pred_check_branch
      %330 = sbr.rel (0) target = $region29
    $region28: #{tpu_custom_call.1} parent=1 // pred_region
      %331 = dma.done [#allocation4], 32
    $region29: #{tpu_custom_call.1} parent=1 // pred_fallthru
      _
    %332 = vsyncpa [#allocation3], 1
    %333 = vsyncpa [#allocation6], 1
    %334 = vsyncpa [#allocation4], 1

</llo_original>
